<compile_context>
chip_gen: v6e
topology: v6e:2x2x1
jax: 0.10.0
libtpu: 0.0.40
codegen_flags: <defaults>
</compile_context>

<pallas_src>
import functools

import jax
import jax.numpy as jnp
from jax.experimental import pallas as pl
from jax.experimental.pallas import tpu as pltpu

_LANE = 128
_SUBLANE = 8


def _round_up(x, m):
    return ((x + m - 1) // m) * m


def _cdiv(a, b):
    return -(-a // b)


def _vmem_budget_and_limit():
    """(resident-data budget bytes, vmem_limit_bytes) — generation aware."""
    try:
        phys = int(pltpu.get_tpu_info().vmem_capacity_bytes)
    except Exception:
        phys = 64 * 1024 * 1024          # assume the smallest (v7x-sized) VMEM
    # ~3/4 of physical VMEM for the scoped limit (48 MiB on v7x, 80 MiB cap on
    # the 128 MiB parts), and leave ~8 MiB headroom for Pallas internals.
    limit = min((phys * 3) // 4, 80 * 1024 * 1024)
    budget = max(limit - 8 * 1024 * 1024, limit // 2)
    return budget, limit


# --------------------------------------------------------------------------
# Simple path: full batch reduction inside each (N, tf) block.
# --------------------------------------------------------------------------
def _norm_kernel(x_ref, o_ref, *, eps, n, f, tf):
    x = x_ref[...].astype(jnp.float32)
    if f % tf != 0:
        # Ragged last feature tile: zero out-of-bounds lanes (their outputs are
        # clipped on write anyway; masking keeps the math well-defined).
        col = jax.lax.broadcasted_iota(jnp.int32, x.shape, 1) + pl.program_id(0) * tf
        x = jnp.where(col < f, x, jnp.float32(0.0))
    mean = jnp.mean(x, axis=0, keepdims=True)                      # (1, tf)
    centered = x - mean
    # Unbiased variance (torch.std default): sum((x - mean)^2) / (N - 1).
    var = jnp.sum(centered * centered, axis=0, keepdims=True) * jnp.float32(1.0 / (n - 1))
    inv = pl.reciprocal(jnp.sqrt(var) + jnp.float32(eps), approx=False)  # (1, tf)
    # Recompute (x - mean) at the store so `centered` need not stay live.
    o_ref[...] = ((x - mean) * inv).astype(o_ref.dtype)


def _simple_tf(n, f, itemsize, budget):
    """Feature tile width for the simple path, or None -> chunked path."""
    # Resident bytes per feature column: (in + out) x 2 pipeline buffers in
    # x.dtype plus ~2 live (N, tf) f32 in-kernel temps (upcast + centered).
    per_col = n * (4 * itemsize + 2 * 4)
    tf_cap = (budget // per_col) // _LANE * _LANE
    if tf_cap < 4 * _LANE:
        return None                      # even a 512-lane full-N tile won't fit
    f_pad = _round_up(f, _LANE)
    if f_pad <= tf_cap:
        # Everything fits; split only enough to give the grid >= ~8 steps
        # (2 v7x cores x pipeline depth), never below 512 lanes.
        tf = max(4 * _LANE, _round_up(_cdiv(f_pad, 8), _LANE))
        return min(tf, f_pad)
    return tf_cap


# --------------------------------------------------------------------------
# Chunked (large-N) path: two pallas_calls, ~3 HBM passes total.
# --------------------------------------------------------------------------
def _stats_kernel(x_ref, mean_ref, inv_ref, sum_sc, sumsq_sc, *, eps, n, tn):
    k = pl.program_id(1)

    @pl.when(k == 0)
    def _init():
        sum_sc[...] = jnp.zeros_like(sum_sc)
        sumsq_sc[...] = jnp.zeros_like(sumsq_sc)

    x = x_ref[...].astype(jnp.float32)
    if n % tn != 0:
        # Mask rows past the batch edge in the ragged last N chunk.
        row = jax.lax.broadcasted_iota(jnp.int32, x.shape, 0) + k * tn
        x = jnp.where(row < n, x, jnp.float32(0.0))
    sum_sc[...] += jnp.sum(x, axis=0, keepdims=True)
    sumsq_sc[...] += jnp.sum(x * x, axis=0, keepdims=True)

    @pl.when(k == pl.num_programs(1) - 1)
    def _finish():
        mean = sum_sc[...] * jnp.float32(1.0 / n)
        # One-pass unbiased variance; slightly less robust than the two-pass
        # form when |mean| >> std, but keeps HBM traffic at ~3 passes.
        var = (sumsq_sc[...] - jnp.float32(n) * mean * mean) * jnp.float32(1.0 / (n - 1))
        var = jnp.maximum(var, jnp.float32(0.0))
        inv = pl.reciprocal(jnp.sqrt(var) + jnp.float32(eps), approx=False)
        mean_ref[...] = mean
        inv_ref[...] = inv


def _apply_kernel(x_ref, mean_ref, inv_ref, o_ref):
    x = x_ref[...].astype(jnp.float32)
    o_ref[...] = ((x - mean_ref[...]) * inv_ref[...]).astype(o_ref.dtype)


def _chunked_tiles(n, f, itemsize, budget):
    f_pad = _round_up(f, _LANE)
    tf = min(f_pad, 16 * _LANE)          # lane-dense stores, modest tile width
    per_elem = 4 * itemsize + 2 * 4      # pipeline bufs + f32 temps per element

    def tn_for(t):
        return (budget // (t * per_elem)) // _SUBLANE * _SUBLANE

    tn = tn_for(tf)
    while tn < _SUBLANE and tf > _LANE:
        tf -= _LANE
        tn = tn_for(tf)
    tn = max(_SUBLANE, min(tn, _round_up(n, _SUBLANE)))
    return tn, tf


def _norm_chunked(x2d, eps, itemsize, budget, vmem_limit):
    n, f = x2d.shape
    tn, tf = _chunked_tiles(n, f, itemsize, budget)
    grid_f = _cdiv(f, tf)
    grid_n = _cdiv(n, tn)

    mean, inv = pl.pallas_call(
        functools.partial(_stats_kernel, eps=eps, n=n, tn=tn),
        out_shape=(jax.ShapeDtypeStruct((1, f), jnp.float32),
                   jax.ShapeDtypeStruct((1, f), jnp.float32)),
        grid_spec=pltpu.PrefetchScalarGridSpec(
            num_scalar_prefetch=0,
            grid=(grid_f, grid_n),
            in_specs=[pl.BlockSpec((tn, tf), lambda i, k: (k, i))],
            out_specs=[pl.BlockSpec((1, tf), lambda i, k: (0, i)),
                       pl.BlockSpec((1, tf), lambda i, k: (0, i))],
            scratch_shapes=[pltpu.VMEM((1, tf), jnp.float32),
                            pltpu.VMEM((1, tf), jnp.float32)]),
        compiler_params=pltpu.CompilerParams(
            dimension_semantics=("parallel", "arbitrary"),
            vmem_limit_bytes=vmem_limit),
    )(x2d)

    out2d = pl.pallas_call(
        _apply_kernel,
        out_shape=jax.ShapeDtypeStruct((n, f), x2d.dtype),
        grid_spec=pltpu.PrefetchScalarGridSpec(
            num_scalar_prefetch=0,
            grid=(grid_f, grid_n),
            in_specs=[pl.BlockSpec((tn, tf), lambda i, k: (k, i)),
                      pl.BlockSpec((1, tf), lambda i, k: (0, i)),
                      pl.BlockSpec((1, tf), lambda i, k: (0, i))],
            out_specs=pl.BlockSpec((tn, tf), lambda i, k: (k, i)),
        ),
        compiler_params=pltpu.CompilerParams(
            dimension_semantics=("parallel", "parallel"),
            vmem_limit_bytes=vmem_limit),
    )(x2d, mean, inv)
    return out2d


# --------------------------------------------------------------------------
# Public wrapper.
# --------------------------------------------------------------------------
def norm_block(x, eps=1e-7, *, _budget_override=None):
    """x: (N, ...) float array.  Returns (x - mean_0) / (std_0 + eps)."""
    n = x.shape[0]
    assert n >= 2, "unbiased std (torch.std default) needs N >= 2"
    f = 1
    for d in x.shape[1:]:
        f *= d
    x2d = x.reshape(n, f)                 # contiguous reshape, layout no-op
    itemsize = jnp.dtype(x.dtype).itemsize

    budget, vmem_limit = _vmem_budget_and_limit()
    if _budget_override is not None:      # test hook to exercise the chunked path
        budget = _budget_override

    tf = _simple_tf(n, f, itemsize, budget)
    if tf is None:
        out2d = _norm_chunked(x2d, eps, itemsize, budget, vmem_limit)
    else:
        grid_f = _cdiv(f, tf)
        out2d = pl.pallas_call(
            functools.partial(_norm_kernel, eps=eps, n=n, f=f, tf=tf),
            out_shape=jax.ShapeDtypeStruct((n, f), x.dtype),
            grid_spec=pltpu.PrefetchScalarGridSpec(
                num_scalar_prefetch=0,
                grid=(grid_f,),
                in_specs=[pl.BlockSpec((n, tf), lambda i: (0, i))],
                out_specs=pl.BlockSpec((n, tf), lambda i: (0, i)),
            ),
            compiler_params=pltpu.CompilerParams(
                dimension_semantics=("parallel",),
                vmem_limit_bytes=vmem_limit),
            cost_estimate=pl.CostEstimate(
                flops=5 * n * f,
                transcendentals=2 * f,            # sqrt + reciprocal per column
                bytes_accessed=2 * n * f * itemsize),
        )(x2d)
    return out2d.reshape(x.shape)


def _reference(x, eps):
    mean = jnp.mean(x, axis=0)
    std = jnp.sqrt(jnp.sum((x - mean) ** 2, axis=0) / (x.shape[0] - 1))
    return (x - mean) / (std + eps)


if __name__ == "__main__":
    key = jax.random.PRNGKey(0)
    eps = 1e-7

    # Main (simple-path) test: NCHW, batch >= 2 for the unbiased std.
    x = jax.random.normal(key, (8, 4, 16, 16), dtype=jnp.float32)
    out = jax.block_until_ready(norm_block(x, eps=eps))
    ref = _reference(x, eps)
    assert out.shape == x.shape and out.dtype == x.dtype
    assert jnp.max(jnp.abs(out - ref)) < 1e-4

    # Exercise the chunked (large-N) path with a forced tiny VMEM budget.
    x2 = jax.random.normal(jax.random.PRNGKey(1), (16, 4, 16, 16), dtype=jnp.float32)
    out2 = jax.block_until_ready(norm_block(x2, eps=eps, _budget_override=100_000))
    ref2 = _reference(x2, eps)
    assert out2.shape == x2.shape and out2.dtype == x2.dtype
    assert jnp.max(jnp.abs(out2 - ref2)) < 1e-4

    print("KERNEL_OK")
</pallas_src>

<mosaic_0001>
module attributes {stable_mosaic.version = 11 : i64} {
  func.func @_norm_kernel(%arg0: i32, %arg1: memref<8x512xf32, #tpu.memory_space<vmem>>, %arg2: memref<8x512xf32, #tpu.memory_space<vmem>>) attributes {dimension_semantics = [#tpu.dimension_semantics<parallel>], iteration_bounds = array<i64: 2>, scalar_prefetch = 0 : i64, scratch_operands = 0 : i64, tpu.core_type = #tpu.core_type<tc>, window_params = [{transform_indices = @transform_0, window_bounds = array<i64: 8, 512>}, {transform_indices = @transform_1, window_bounds = array<i64: 8, 512>}]} {
    %c0 = arith.constant 0 : index
    %c0_0 = arith.constant 0 : index
    %0 = vector.load %arg1[%c0, %c0_0] : memref<8x512xf32, #tpu.memory_space<vmem>>, vector<8x512xf32>
    %cst = arith.constant dense<0.000000e+00> : vector<512xf32>
    %1 = vector.multi_reduction <add>, %0, %cst [0] : vector<8x512xf32> to vector<512xf32>
    %2 = vector.shape_cast %1 : vector<512xf32> to vector<1x512xf32>
    %cst_1 = arith.constant 8.000000e+00 : f32
    %3 = vector.broadcast %cst_1 : f32 to vector<1x512xf32>
    %4 = arith.divf %2, %3 : vector<1x512xf32>
    %5 = vector.broadcast %4 : vector<1x512xf32> to vector<8x512xf32>
    %6 = arith.subf %0, %5 : vector<8x512xf32>
    %7 = arith.mulf %6, %6 : vector<8x512xf32>
    %cst_2 = arith.constant dense<0.000000e+00> : vector<512xf32>
    %8 = vector.multi_reduction <add>, %7, %cst_2 [0] : vector<8x512xf32> to vector<512xf32>
    %9 = vector.shape_cast %8 : vector<512xf32> to vector<1x512xf32>
    %cst_3 = arith.constant 0.142857149 : f32
    %10 = vector.broadcast %cst_3 : f32 to vector<1x512xf32>
    %11 = arith.mulf %9, %10 : vector<1x512xf32>
    %12 = math.sqrt %11 : vector<1x512xf32>
    %cst_4 = arith.constant 1.000000e-07 : f32
    %13 = vector.broadcast %cst_4 : f32 to vector<1x512xf32>
    %14 = arith.addf %12, %13 : vector<1x512xf32>
    %15 = tpu.reciprocal %14 : vector<1x512xf32> -> vector<1x512xf32>
    %16 = vector.broadcast %4 : vector<1x512xf32> to vector<8x512xf32>
    %17 = arith.subf %0, %16 : vector<8x512xf32>
    %18 = vector.broadcast %15 : vector<1x512xf32> to vector<8x512xf32>
    %19 = arith.mulf %17, %18 : vector<8x512xf32>
    %c0_5 = arith.constant 0 : index
    %c0_6 = arith.constant 0 : index
    %20 = vector.load %arg2[%c0_5, %c0_6] : memref<8x512xf32, #tpu.memory_space<vmem>>, vector<8x512xf32>
    tpu.vector_store %arg2[%c0_5, %c0_6], %19 {strides = array<i32>} : memref<8x512xf32, #tpu.memory_space<vmem>>, vector<8x512xf32>,
    return
  }
  func.func @transform_0(%arg0: i32) -> (i32, i32) {
    %c0_i32 = arith.constant 0 : i32
    %c0_i32_0 = arith.constant 0 : i32
    return %c0_i32, %arg0 : i32, i32
  }
  func.func @transform_1(%arg0: i32) -> (i32, i32) {
    %c0_i32 = arith.constant 0 : i32
    %c0_i32_0 = arith.constant 0 : i32
    return %c0_i32, %arg0 : i32, i32
  }
}

</mosaic_0001>

<llo_original>
// kernel: tpu_custom_call.1
$region0: #{tpu_custom_call.1}
  #allocation0 [shape = 'u32[]', space=smem, size = 0x4, offset = 0x4, fixed_abs, tag = 'smem constant byte address 0x4 - core index']
  #allocation1 [shape = 'u32[144,128]{1,0:T(1,128)}', space=vmem, size = 0x12000, scoped, tag = 'internal scratch']
  %s0 = inlined_call_operand.hbm [shape: f32[8,1024], index: 0, kind: input, shape index: {}]
  %s1 = inlined_call_operand.hbm [shape: f32[8,1024], index: 1, kind: output, shape index: {}]
  %s2 = sld [smem:[#allocation0]]
  $region41: #{tpu_custom_call.1} parent=0
    _
  %s4 = ssub.s32 1, %s2
  %s5 = scalar_select 0, %s4, %s2
  $region1: #{tpu_custom_call.1} parent=0
    #allocation2 [shape = 'u8[32768]{0}', space=vmem, size = 0x8000, scoped, tag = 'input window, operand 0']
    #allocation3 [shape = 's32[2]{0}', space=sflag, size = 0x8, scoped, tag = 'scoped memory for tpu_custom_call.1']
    #allocation4 [shape = 's32[2]{0}', space=sflag, size = 0x8, scoped, tag = 'scoped memory for tpu_custom_call.1']
    #allocation5 [shape = 'u8[32768]{0}', space=vmem, size = 0x8000, scoped, tag = 'output window, operand 0']
    %6 = vsyncpa [#allocation3], 0
    %s7 = scalar_lea.sflag [#allocation3], 1
    %8 = vsyncpa %s7, 0
    %9 = vsyncpa [#allocation4], 0
    %s10 = scalar_lea.sflag [#allocation4], 1
    %11 = vsyncpa %s10, 0
    loop: start=0, step=1, limit=4
    $region2: #{tpu_custom_call.1} parent=1 // loop_pre_header
      _
    $region3: #{tpu_custom_call.1} parent=1 // loop_header
      %s13 = sphi 0, %s17
      %p14 = scmp.ge.s32.totalorder %s13, 4
      %s23 = sphi 0, %s25
      %s26 = sphi 0, %s23
      %s27 = sphi 0, %s26
      %s43 = sphi 0, %s27
      %s49 = sphi 0, %s51
      %s52 = sphi 0, %s49
      %s53 = sphi 0, %s52
      %s69 = sphi 0, %s53
    $region4: #{tpu_custom_call.1} parent=1 // loop_header_branch
      %16 = sbr.rel (%p14) target = $region8
    $region5: #{tpu_custom_call.1} parent=1 // loop_body
      %s18 = ssub.s32 %s13, 1
      %s19 = ssub.s32 %s13, 2
      %s20 = sadd.s32 %s13, 1
      %s21 = ssub.s32 %s13, %s20
      %p22 = scmp.eq.s32.totalorder %s21, 0
      %s24 = sadd.s32 %s23, 1
      %s25 = scalar_select %p22, %s23, %s24
      %p28 = pneg %p22
      %p29 = scmp.eq.s32.totalorder %s13, 1
      %p30 = por %p28, %p29
      %p31 = scmp.ne.s32.totalorder %s23, %s26
      %p32 = scmp.eq.s32.totalorder %s13, 0
      %p33 = por %p31, %p32
      %p34 = scmp.ne.s32.totalorder %s23, %s26
      %p35 = scmp.eq.s32.totalorder %s18, 1
      %p36 = por %p34, %p35
      %p37 = scmp.ne.s32.totalorder %s26, %s27
      %p38 = scmp.eq.s32.totalorder %s18, 0
      %p39 = por %p37, %p38
      %p40 = scmp.ne.s32.totalorder %s26, %s27
      %p41 = scmp.eq.s32.totalorder %s19, 1
      %p42 = por %p40, %p41
      %p44 = scmp.ne.s32.totalorder %s27, %s43
      %p45 = scmp.eq.s32.totalorder %s19, 0
      %p46 = por %p44, %p45
      %s47 = ssub.s32 %s13, %s20
      %p48 = scmp.eq.s32.totalorder %s47, 0
      %s50 = sadd.s32 %s49, 1
      %s51 = scalar_select %p48, %s49, %s50
      %p54 = pneg %p48
      %p55 = scmp.eq.s32.totalorder %s13, 1
      %p56 = por %p54, %p55
      %p57 = scmp.ne.s32.totalorder %s49, %s52
      %p58 = scmp.eq.s32.totalorder %s13, 0
      %p59 = por %p57, %p58
      %p60 = scmp.ne.s32.totalorder %s49, %s52
      %p61 = scmp.eq.s32.totalorder %s18, 1
      %p62 = por %p60, %p61
      %p63 = scmp.ne.s32.totalorder %s52, %s53
      %p64 = scmp.eq.s32.totalorder %s18, 0
      %p65 = por %p63, %p64
      %p66 = scmp.ne.s32.totalorder %s52, %s53
      %p67 = scmp.eq.s32.totalorder %s19, 1
      %p68 = por %p66, %p67
      %p70 = scmp.ne.s32.totalorder %s53, %s69
      %p71 = scmp.eq.s32.totalorder %s19, 0
      %p72 = por %p70, %p71
      %p73 = scmp.le.s32.totalorder 1, %s13
      %p74 = scmp.lt.s32.totalorder %s13, 3
      %p75 = pnand %p73, %p74
      %p76 = pneg %p75
      // Predicated region
      $region9: #{tpu_custom_call.1} parent=5 // pred_check
        _
      $region10: #{tpu_custom_call.1} parent=5 // pred_check_branch
        %78 = sbr.rel (%p75) target = $region12
      $region11: #{tpu_custom_call.1} parent=5 // pred_region
        %s79 = ssub.s32 %s13, 1
      $region12: #{tpu_custom_call.1} parent=5 // pred_fallthru
        _
      %p80 = scmp.lt.s32.totalorder %s13, 2
      // Predicated region
      $region13: #{tpu_custom_call.1} parent=5 // pred_check
        %p81 = pneg %p80
      $region14: #{tpu_custom_call.1} parent=5 // pred_check_branch
        %83 = sbr.rel (%p81) target = $region16
      $region15: #{tpu_custom_call.1} parent=5 // pred_region
        // Predicated region
        $region17: #{tpu_custom_call.1} parent=15 // pred_check
          %p84 = pneg %p33
        $region18: #{tpu_custom_call.1} parent=15 // pred_check_branch
          %86 = sbr.rel (%p84) target = $region20
        $region19: #{tpu_custom_call.1} parent=15 // pred_region
          %s87 = sand.u32 %s23, 1
          %s88 = scalar_lea.sflag [#allocation3], %s87
          %s89 = sand.u32 %s23, 1
          %s90 = smul.addr %s89, 32
          %s91 = scalar_lea.vmem [#allocation2], %s90
          %s92 = smul.u32 4, %s13
          %s94 = ssub.s32 512, 512
          %95 = vsyncadd %s88, %s94
          %s96 = smul.addr %s92, 128
          %s97 = scalar_lea.hbm %s0, %s96
          %s99 = sshll.u32 %s91, 4
          %s100 = int_to_ptr.vmem [resolvable:$true] %s99
          %102 = dma.hbm_to_vmem [thread:$0]  %s97, 512, %s100, %s88
        $region20: #{tpu_custom_call.1} parent=15 // pred_fallthru
          _
      $region16: #{tpu_custom_call.1} parent=5 // pred_fallthru
        _
      %p103 = scmp.le.s32.totalorder 1, %s13
      %p104 = scmp.lt.s32.totalorder %s13, 3
      %p105 = pnand %p103, %p104
      %p106 = pneg %p105
      // Predicated region
      $region21: #{tpu_custom_call.1} parent=5 // pred_check
        _
      $region22: #{tpu_custom_call.1} parent=5 // pred_check_branch
        %108 = sbr.rel (%p105) target = $region24
      $region23: #{tpu_custom_call.1} parent=5 // pred_region
        %s109 = ssub.s32 %s13, 1
        %s110 = sand.u32 %s26, 1
        %s111 = scalar_lea.sflag [#allocation3], %s110
        %s112 = sand.u32 %s26, 1
        %s113 = smul.addr %s112, 32
        %s114 = scalar_lea.vmem [#allocation2], %s113
        // Predicated region
        $region25: #{tpu_custom_call.1} parent=23 // pred_check
          %p115 = pneg %p39
        $region26: #{tpu_custom_call.1} parent=23 // pred_check_branch
          %117 = sbr.rel (%p115) target = $region28
        $region27: #{tpu_custom_call.1} parent=23 // pred_region
          %118 = dma.done %s111, 512
        $region28: #{tpu_custom_call.1} parent=23 // pred_fallthru
          _
        %s119 = sand.u32 %s26, 1
        %s120 = scalar_lea.sflag [#allocation3], %s119
        %s121 = sand.u32 %s26, 1
        %s122 = smul.addr %s121, 32
        %s123 = scalar_lea.vmem [#allocation2], %s122
        %p124 = pneg %p39
        %p125 = pneg %p36
        %p126 = pneg %p65
        %p127 = pneg %p62
        %s128 = sand.u32 %s52, 1
        %s129 = scalar_lea.sflag [#allocation4], %s128
        %s130 = sand.u32 %s52, 1
        %s131 = smul.addr %s130, 32
        %s132 = scalar_lea.vmem [#allocation5], %s131
        %s133 = smul.u32 4, %s18
        %s134 = smul.u32 4, %s18
        %v135 = vld [vmem:[%s114] sm:$0xff]
        %v136 = vld [vmem:[%s114 + $0x8] sm:$0xff]
        %v137 = vld [vmem:[%s114 + $0x10] sm:$0xff]
        %v138 = vld [vmem:[%s114 + $0x18] sm:$0xff]
        %v139 = vrot.slane %v135, 4
        %v140 = vadd.f32 %v135, %v139
        %v141 = vrot.slane %v140, 2
        %v142 = vadd.f32 %v140, %v141
        %v143 = vrot.slane %v142, 1
        %v144 = vadd.f32 %v142, %v143
        %v145 = vrot.slane %v136, 4
        %v146 = vadd.f32 %v136, %v145
        %v147 = vrot.slane %v146, 2
        %v148 = vadd.f32 %v146, %v147
        %v149 = vrot.slane %v148, 1
        %v150 = vadd.f32 %v148, %v149
        %v151 = vrot.slane %v137, 4
        %v152 = vadd.f32 %v137, %v151
        %v153 = vrot.slane %v152, 2
        %v154 = vadd.f32 %v152, %v153
        %v155 = vrot.slane %v154, 1
        %v156 = vadd.f32 %v154, %v155
        %v157 = vrot.slane %v138, 4
        %v158 = vadd.f32 %v138, %v157
        %v159 = vrot.slane %v158, 2
        %v160 = vadd.f32 %v158, %v159
        %v161 = vrot.slane %v160, 1
        %v162 = vadd.f32 %v160, %v161
        %v163 = vrcp.pop 8.0
        %v164 = vmul.f32 %v144, %v163
        %v165 = vmul.f32 %v150, %v163
        %v166 = vmul.f32 %v156, %v163
        %v167 = vmul.f32 %v162, %v163
        %v168 = vsub.f32 %v135, %v164
        %v169 = vsub.f32 %v136, %v165
        %v170 = vsub.f32 %v137, %v166
        %v171 = vsub.f32 %v138, %v167
        %v172 = vmul.f32 %v168, %v168
        %v173 = vmul.f32 %v169, %v169
        %v174 = vmul.f32 %v170, %v170
        %v175 = vmul.f32 %v171, %v171
        %v176 = vrot.slane %v172, 4
        %v177 = vadd.f32 %v172, %v176
        %v178 = vrot.slane %v177, 2
        %v179 = vadd.f32 %v177, %v178
        %v180 = vrot.slane %v179, 1
        %v181 = vadd.f32 %v179, %v180
        %v182 = vrot.slane %v173, 4
        %v183 = vadd.f32 %v173, %v182
        %v184 = vrot.slane %v183, 2
        %v185 = vadd.f32 %v183, %v184
        %v186 = vrot.slane %v185, 1
        %v187 = vadd.f32 %v185, %v186
        %v188 = vrot.slane %v174, 4
        %v189 = vadd.f32 %v174, %v188
        %v190 = vrot.slane %v189, 2
        %v191 = vadd.f32 %v189, %v190
        %v192 = vrot.slane %v191, 1
        %v193 = vadd.f32 %v191, %v192
        %v194 = vrot.slane %v175, 4
        %v195 = vadd.f32 %v175, %v194
        %v196 = vrot.slane %v195, 2
        %v197 = vadd.f32 %v195, %v196
        %v198 = vrot.slane %v197, 1
        %v199 = vadd.f32 %v197, %v198
        %v200 = vmul.f32 %v181, 0.14285715
        %v201 = vmul.f32 %v187, 0.14285715
        %v202 = vmul.f32 %v193, 0.14285715
        %v203 = vmul.f32 %v199, 0.14285715
        %v204 = vrsqrt.pop %v200
        %v205 = vmul.f32 %v200, %v204
        %vm206 = vcmp.eq.f32.partialorder %v200, inf
        %v207 = vsel %vm206, %v200, %v205
        %vm208 = vcmp.eq.f32.partialorder %v200, 0.0
        %v209 = vand.u32 %v200, 2147483648
        %v210 = vsel %vm208, %v209, %v207
        %v211 = vrsqrt.pop %v201
        %v212 = vmul.f32 %v201, %v211
        %vm213 = vcmp.eq.f32.partialorder %v201, inf
        %v214 = vsel %vm213, %v201, %v212
        %vm215 = vcmp.eq.f32.partialorder %v201, 0.0
        %v216 = vand.u32 %v201, 2147483648
        %v217 = vsel %vm215, %v216, %v214
        %v218 = vrsqrt.pop %v202
        %v219 = vmul.f32 %v202, %v218
        %vm220 = vcmp.eq.f32.partialorder %v202, inf
        %v221 = vsel %vm220, %v202, %v219
        %vm222 = vcmp.eq.f32.partialorder %v202, 0.0
        %v223 = vand.u32 %v202, 2147483648
        %v224 = vsel %vm222, %v223, %v221
        %v225 = vrsqrt.pop %v203
        %v226 = vmul.f32 %v203, %v225
        %vm227 = vcmp.eq.f32.partialorder %v203, inf
        %v228 = vsel %vm227, %v203, %v226
        %vm229 = vcmp.eq.f32.partialorder %v203, 0.0
        %v230 = vand.u32 %v203, 2147483648
        %v231 = vsel %vm229, %v230, %v228
        %v232 = vadd.f32 %v210, 1e-07
        %v233 = vadd.f32 %v217, 1e-07
        %v234 = vadd.f32 %v224, 1e-07
        %v235 = vadd.f32 %v231, 1e-07
        %v236 = vrcp.pop %v232
        %v237 = vrcp.pop %v233
        %v238 = vrcp.pop %v234
        %v239 = vrcp.pop %v235
        %v240 = vmul.f32 %v168, %v236
        %v241 = vmul.f32 %v169, %v237
        %v242 = vmul.f32 %v170, %v238
        %v243 = vmul.f32 %v171, %v239
        %244 = vst [vmem:[%s132] sm:$0xff] %v240
        %245 = vst [vmem:[%s132 + $0x8] sm:$0xff] %v241
        %246 = vst [vmem:[%s132 + $0x10] sm:$0xff] %v242
        %247 = vst [vmem:[%s132 + $0x18] sm:$0xff] %v243
        %s248 = sand.u32 %s52, 1
        %s249 = scalar_lea.sflag [#allocation4], %s248
        %s250 = sand.u32 %s52, 1
        %s251 = smul.addr %s250, 32
        %s252 = scalar_lea.vmem [#allocation5], %s251
        // Predicated region
        $region29: #{tpu_custom_call.1} parent=23 // pred_check
          %p253 = pneg %p62
        $region30: #{tpu_custom_call.1} parent=23 // pred_check_branch
          %255 = sbr.rel (%p253) target = $region32
        $region31: #{tpu_custom_call.1} parent=23 // pred_region
          %s256 = smul.u32 4, %s18
          %s258 = ssub.s32 512, 512
          %259 = vsyncadd %s249, %s258
          %s260 = smul.addr %s256, 128
          %s261 = scalar_lea.hbm %s1, %s260
          %s263 = sshll.u32 %s252, 4
          %s264 = int_to_ptr.vmem [resolvable:$true] %s263
          %266 = dma.vmem_to_hbm [thread:$0]  %s264, 512, %s261, %s249
        $region32: #{tpu_custom_call.1} parent=23 // pred_fallthru
          _
      $region24: #{tpu_custom_call.1} parent=5 // pred_fallthru
        _
      %p267 = scmp.le.s32.totalorder 2, %s13
      // Predicated region
      $region33: #{tpu_custom_call.1} parent=5 // pred_check
        %p268 = pneg %p267
      $region34: #{tpu_custom_call.1} parent=5 // pred_check_branch
        %270 = sbr.rel (%p268) target = $region36
      $region35: #{tpu_custom_call.1} parent=5 // pred_region
        %s271 = ssub.s32 %s13, 2
        // Predicated region
        $region37: #{tpu_custom_call.1} parent=35 // pred_check
          %p272 = pneg %p68
        $region38: #{tpu_custom_call.1} parent=35 // pred_check_branch
          %274 = sbr.rel (%p272) target = $region40
        $region39: #{tpu_custom_call.1} parent=35 // pred_region
          %s275 = sand.u32 %s53, 1
          %s276 = scalar_lea.sflag [#allocation4], %s275
          %s277 = sand.u32 %s53, 1
          %s278 = smul.addr %s277, 32
          %s279 = scalar_lea.vmem [#allocation5], %s278
          %280 = dma.done %s276, 512
        $region40: #{tpu_custom_call.1} parent=35 // pred_fallthru
          _
      $region36: #{tpu_custom_call.1} parent=5 // pred_fallthru
        _
    $region6: #{tpu_custom_call.1} parent=1 // loop_footer
      %s17 = sadd.s32 1, %s13
    $region7: #{tpu_custom_call.1} parent=1 // loop_footer_branch
      %12 = sbr.rel target = $region3
    $region8: #{tpu_custom_call.1} parent=1 // loop_exit
      _
    %281 = vsyncpa [#allocation3], 1
    %s282 = scalar_lea.sflag [#allocation3], 1
    %283 = vsyncpa %s282, 1
    %284 = vsyncpa [#allocation4], 1
    %s285 = scalar_lea.sflag [#allocation4], 1
    %286 = vsyncpa %s285, 1

</llo_original>
